<compile_context>
chip_gen: v7x
topology: tpu7x:2x2x1
jax: 0.10.0
libtpu: 0.0.40
codegen_flags: <defaults>
</compile_context>

<pallas_src>
import functools
import math

import jax
import jax.numpy as jnp
from jax.experimental import pallas as pl
from jax.experimental.pallas import tpu as pltpu


_LANE = 128
_SUBLANE = 8


def _round_up(x, m):
    return (x + m - 1) // m * m


def _tpu_defaults():
    """(vmem_limit_bytes, per-step VMEM budget, prefer 128-wide MXU tiles)."""
    kind = ""
    try:
        kind = jax.devices()[0].device_kind.lower()
    except Exception:
        pass
    big_vmem = False
    try:
        cap = getattr(pltpu.get_tpu_info(), "vmem_capacity_bytes", None)
        if cap is not None and int(cap) >= 128 * 1024 * 1024:
            big_vmem = True
    except Exception:
        pass
    if not big_vmem and any(t in kind for t in ("v2", "v3", "v4", "v5", "v6")):
        big_vmem = True                      # 128 MiB VMEM parts
    vmem_limit = 64 * 1024 * 1024 if big_vmem else 32 * 1024 * 1024
    budget = int(vmem_limit * 0.6)           # per-step total incl. 2x double-buffering
    prefer_128_mxu = any(t in kind for t in ("v2", "v3", "v4", "v5"))
    return vmem_limit, budget, prefer_128_mxu


def _conv_row_tile(nho, wo, k, kc, tn, in_size, out_size, budget):
    """Rows of (N*Ho) per grid step: (tr*Wo) %% sublane == 0, >=4 steps when possible,
    blocks + intermediates + double-buffering within the VMEM budget."""
    sub = 16 if min(in_size, out_size) == 2 else _SUBLANE
    g = sub // math.gcd(wo, sub)
    if nho <= g:
        return nho
    cap = (nho // 4) // g * g if nho >= 4 * g else g     # >= 4 grid steps (2 per v7x TC)
    target = max(g, (2048 // max(wo, 1)) // g * g)
    tr = max(g, min(cap, target))

    def fits(t):
        xb = t * k * _round_up(wo, _SUBLANE) * _round_up(kc, _LANE) * in_size
        ob = _round_up(t * wo, _SUBLANE) * tn * out_size
        wb = k * _round_up(kc, _SUBLANE) * tn * in_size
        bb = _SUBLANE * tn * 4
        inter = _round_up(t * wo, _SUBLANE) * (tn + _round_up(kc, _LANE)) * 4
        return 2 * (xb + ob) + 2 * (wb + bb) + inter <= budget

    while tr > g and not fits(tr):
        tr -= g
    return min(tr, nho)


def _pool_row_tile(m_out, p, w, wo, itemsize, budget):
    """Output rows (of N*C*Ho) per grid step, aligned so the input block is (8,128)-legal."""
    align = 16 if itemsize == 2 else _SUBLANE
    if m_out <= align:
        return m_out
    cap = (m_out // 4) // align * align if m_out >= 4 * align else align
    target = max(align, (4096 // max(p, 1)) // align * align)
    tr = max(align, min(cap, target))

    def fits(t):
        xb = _round_up(t * p, _SUBLANE) * _round_up(w, _LANE) * itemsize
        ob = _round_up(t, _SUBLANE) * _round_up(wo, _LANE) * itemsize
        cb = _round_up(w, _SUBLANE) * _round_up(wo, _LANE) * 4
        inter = (p + 2) * _round_up(t, _SUBLANE) * _round_up(w, _LANE) * 4
        return 2 * (xb + ob) + 2 * cb + inter <= budget

    while tr > align and not fits(tr):
        tr -= align
    return min(tr, m_out)


# ---------------------------------------------------------------------------
# Pallas kernels
# ---------------------------------------------------------------------------
def _conv_kernel(x_ref, w_ref, b_ref, o_ref, *, k, wo, apply_relu):
    # x_ref: (tr, k, Wo, k*C) tile of the NHWC view (rows of N*Ho)
    # w_ref: (k, k*C, tn) per-dh weight slabs    b_ref: (1, tn) f32
    # o_ref: (tr*Wo, tn)
    tr = x_ref.shape[0]
    kc = x_ref.shape[3]
    acc = None
    for dh in range(k):                                  # k accumulated MXU matmuls
        lhs = x_ref[:, dh].reshape(tr * wo, kc)          # free leading-dim reshape
        part = jnp.dot(lhs, w_ref[dh], preferred_element_type=jnp.float32)
        acc = part if acc is None else acc + part
    acc = acc + b_ref[...]
    if apply_relu:
        acc = jnp.maximum(acc, 0.0)
    o_ref[...] = acc.astype(o_ref.dtype)


def _pool_kernel(x_ref, c_ref, o_ref, *, p, mode):
    # x_ref: (tr*p, W) lane-dense rows of the raw NCHW tensor (W = Wo*p, full dim)
    # c_ref: (W, Wo) f32 lane-compaction matrix          o_ref: (tr, Wo)
    tr = o_ref.shape[0]
    if mode == "max":
        r = x_ref[pl.ds(0, tr, stride=p), :].astype(jnp.float32)
        for dh in range(1, p):                           # sublane-strided dh reduce
            r = jnp.maximum(r, x_ref[pl.ds(dh, tr, stride=p), :].astype(jnp.float32))
        s = r
        for j in range(1, p):                            # windowed max along lanes via
            shifted = jnp.concatenate([r[:, j:], r[:, :j]], axis=-1)   # static shifts
            s = jnp.maximum(s, shifted)
        # Guard +/-inf before the 0/1 selection matmul (0*inf would give NaN).
        s = jnp.clip(s, jnp.finfo(jnp.float32).min, jnp.finfo(jnp.float32).max)
        out = jnp.dot(s, c_ref[...], preferred_element_type=jnp.float32)
    else:  # 'ave'
        r = x_ref[pl.ds(0, tr, stride=p), :].astype(jnp.float32)
        for dh in range(1, p):
            r = r + x_ref[pl.ds(dh, tr, stride=p), :].astype(jnp.float32)
        out = jnp.dot(r, c_ref[...], preferred_element_type=jnp.float32)  # 1/p^2 baked in
    o_ref[...] = out.astype(o_ref.dtype)


# ---------------------------------------------------------------------------
# EncodeLayer wrapper (parameter setup + glue in plain JAX)
# ---------------------------------------------------------------------------
class EncodeLayer:
    """Pallas-TPU port of the PyTorch EncodeLayer forward pass (NCHW in / NCHW out)."""

    def __init__(self, channel_in, channel_out, pool_size, pool,
                 kernel_size="auto", activation="ReLU", batch_norm=False,
                 compute_dtype=None, key=None):
        if pool not in [False, True, "max", "ave"]:
            raise ValueError("Invalid pool keyword")
        if pool is True:
            pool = "max"
        self.pool = pool
        self.pool_size = pool_size
        self.batch_norm = batch_norm
        self.activation = activation
        self.compute_dtype = compute_dtype

        if pool is False:
            if kernel_size == "auto":
                kernel_size = pool_size
            if kernel_size != pool_size:
                # TODO(synk): general kernel_size != stride (overlapping im2col) not implemented.
                raise NotImplementedError("only kernel_size == stride supported")
            if batch_norm:
                # TODO(synk): training-mode BatchNorm2d (batch statistics) not implemented.
                raise NotImplementedError("batch_norm=True path not implemented")
            if activation not in (None, "ReLU"):
                # TODO(synk): only ReLU / None activation implemented.
                raise NotImplementedError("activation must be 'ReLU' or None")
            self.kernel_size = kernel_size
            if key is None:
                key = jax.random.PRNGKey(0)
            kw, kb = jax.random.split(key)
            fan_in = channel_in * kernel_size * kernel_size
            bound = 1.0 / (fan_in ** 0.5)
            # Matches nn.Conv2d default init; the PyTorch module always builds Conv2d
            # with bias=True (its bias_flag is never forwarded), so we always have bias.
            self.weight = jax.random.uniform(
                kw, (channel_out, channel_in, kernel_size, kernel_size),
                jnp.float32, -bound, bound)
            self.bias = jax.random.uniform(
                kb, (channel_out,), jnp.float32, -bound, bound)
        else:
            self.kernel_size = None
            self.weight = None
            self.bias = None

    # -- conv branch --------------------------------------------------------
    def _conv_forward(self, x):
        N, C, H, W = x.shape
        k = self.kernel_size
        Ho, Wo = H // k, W // k
        cout = self.weight.shape[0]
        kc = k * C
        K = k * kc
        cdt = jnp.dtype(self.compute_dtype) if self.compute_dtype is not None else x.dtype
        out_dt = cdt if cdt == jnp.bfloat16 else x.dtype   # bf16 compute => bf16 writeback

        vmem_limit, budget, prefer_128 = _tpu_defaults()

        # One NCHW->NHWC layout pass (channels land in lanes); everything else is fused
        # in the kernel (no HBM patch matrix).
        # TODO(synk): downstream consumers could keep the channels-last [N*Ho*Wo, Cout_pad]
        # kernel output and skip both this pass and the NCHW epilogue below.
        x_nhwc = jnp.transpose(x[:, :, :Ho * k, :Wo * k], (0, 2, 3, 1)).astype(cdt)
        x_view = x_nhwc.reshape(N * Ho, k, Wo, kc)          # free reshape

        # Per-dh weight slabs: w_perdh[dh, dw*C + c, co] = weight[co, c, dh, dw],
        # Cout padded to a lane-dense multiple of 128.
        cp = _round_up(cout, _LANE)
        w_perdh = jnp.transpose(self.weight, (2, 3, 1, 0)).reshape(k, kc, cout).astype(cdt)
        w_perdh = jnp.pad(w_perdh, ((0, 0), (0, 0), (0, cp - cout)))
        b_row = jnp.pad(self.bias.astype(jnp.float32), (0, cp - cout)).reshape(1, cp)

        tn = 256 if (cp % 256 == 0 and not prefer_128) else 128   # 128 on v5e's 128-wide MXU
        n_ct = cp // tn
        in_size = jnp.dtype(cdt).itemsize
        out_size = jnp.dtype(out_dt).itemsize
        tr = _conv_row_tile(N * Ho, Wo, k, kc, tn, in_size, out_size, budget)
        n_mt = pl.cdiv(N * Ho, tr)
        M = N * Ho * Wo

        kernel = functools.partial(_conv_kernel, k=k, wo=Wo,
                                   apply_relu=(self.activation == "ReLU"))
        bytes_accessed = (x_view.size * in_size + w_perdh.size * in_size
                          + b_row.size * 4 + M * cp * out_size)
        out = pl.pallas_call(
            kernel,
            out_shape=jax.ShapeDtypeStruct((M, cp), out_dt),
            grid=(n_mt, n_ct),
            in_specs=[
                pl.BlockSpec((tr, k, Wo, kc), lambda i, j: (i, 0, 0, 0)),
                pl.BlockSpec((k, kc, tn), lambda i, j: (0, 0, j)),
                pl.BlockSpec((1, tn), lambda i, j: (0, j)),
            ],
            out_specs=pl.BlockSpec((tr * Wo, tn), lambda i, j: (i, j)),
            compiler_params=pltpu.CompilerParams(
                dimension_semantics=("parallel", "parallel"),
                vmem_limit_bytes=vmem_limit),
            cost_estimate=pl.CostEstimate(flops=2 * M * K * cp, transcendentals=0,
                                          bytes_accessed=bytes_accessed),
        )(x_view, w_perdh, b_row)

        # Slice to the real Cout before the (small) channels-last -> NCHW epilogue.
        return out[:, :cout].reshape(N, Ho, Wo, cout).transpose(0, 3, 1, 2)

    # -- pooling branch ------------------------------------------------------
    def _pool_forward(self, x):
        N, C, H, W = x.shape
        p = self.pool_size
        Ho, Wo = H // p, W // p
        x = x[:, :, :Ho * p, :Wo * p]
        Wc = Wo * p
        # Free reshape of NCHW into lane-dense rows; no XLA transpose pass.
        x_view = x.reshape(N * C * Ho * p, Wc)
        M_out = N * C * Ho

        vmem_limit, budget, _ = _tpu_defaults()
        itemsize = jnp.dtype(x.dtype).itemsize
        tr = _pool_row_tile(M_out, p, Wc, Wo, itemsize, budget)

        # Lane-compaction matrix applied on the (otherwise idle) MXU.
        # max: 0/1 selector of lane wo*p;   ave: 1/p^2 per (wo) group.
        # TODO(synk): for very wide images (W >~ 2k) tile this (W, Wo) matrix.
        w_idx = jnp.arange(Wc)
        o_idx = jnp.arange(Wo)
        if self.pool == "max":
            cmat = (w_idx[:, None] == o_idx[None, :] * p).astype(jnp.float32)
        else:
            cmat = ((w_idx[:, None] // p) == o_idx[None, :]).astype(jnp.float32) / float(p * p)

        kernel = functools.partial(_pool_kernel, p=p, mode=self.pool)
        bytes_accessed = (x_view.size + M_out * Wo) * itemsize + cmat.size * 4
        # TODO(synk): when Wo < 128 the (tr, Wo) output stores are lane-masked; a flat
        # (n_blocks, tr*Wo) output would be lane-dense but needs an in-kernel lane-merge
        # relayout of the result, which we avoid here (output is only 1/p^2 of the bytes).
        out = pl.pallas_call(
            kernel,
            out_shape=jax.ShapeDtypeStruct((M_out, Wo), x.dtype),
            grid=(pl.cdiv(M_out, tr),),
            in_specs=[
                pl.BlockSpec((tr * p, Wc), lambda i: (i, 0)),
                pl.BlockSpec((Wc, Wo), lambda i: (0, 0)),
            ],
            out_specs=pl.BlockSpec((tr, Wo), lambda i: (i, 0)),
            compiler_params=pltpu.CompilerParams(
                dimension_semantics=("parallel",),
                vmem_limit_bytes=vmem_limit),
            cost_estimate=pl.CostEstimate(
                flops=2 * x_view.size + 2 * M_out * Wc * Wo,
                transcendentals=0, bytes_accessed=bytes_accessed),
        )(x_view, cmat)
        return out.reshape(N, C, Ho, Wo)

    def __call__(self, x):
        if self.pool in ("max", "ave"):
            return self._pool_forward(x)
        return self._conv_forward(x)


# ---------------------------------------------------------------------------
# Pure-JAX references (correctness check only)
# ---------------------------------------------------------------------------
def _ref_conv(x, w, b, stride, relu):
    y = jax.lax.conv_general_dilated(
        x, w, window_strides=(stride, stride), padding="VALID",
        dimension_numbers=("NCHW", "OIHW", "NCHW"))
    y = y + b.reshape(1, -1, 1, 1)
    return jnp.maximum(y, 0.0) if relu else y


def _ref_pool(x, p, mode):
    N, C, H, W = x.shape
    Ho, Wo = H // p, W // p
    xr = x[:, :, :Ho * p, :Wo * p].reshape(N, C, Ho, p, Wo, p)
    return xr.max(axis=(3, 5)) if mode == "max" else xr.mean(axis=(3, 5))


if __name__ == "__main__":
    key = jax.random.PRNGKey(0)
    kx, kp = jax.random.split(key)

    N, Cin, H, W = 2, 4, 16, 16
    Cout, pool_size = 8, 2
    x = jax.random.normal(kx, (N, Cin, H, W), jnp.float32)

    # Conv branch (pool=False): k==stride patch conv + bias + ReLU, f32.
    layer = EncodeLayer(Cin, Cout, pool_size, pool=False, key=kp)
    y = jax.block_until_ready(layer(x))
    y_ref = _ref_conv(x, layer.weight, layer.bias, pool_size, relu=True)
    assert y.shape == (N, Cout, H // pool_size, W // pool_size)
    assert jnp.allclose(y, y_ref, atol=1e-4, rtol=1e-4)

    # Same layer with bf16 compute (halves DMA bytes, f32 accumulation, bf16 writeback).
    layer_bf16 = EncodeLayer(Cin, Cout, pool_size, pool=False, key=kp,
                             compute_dtype=jnp.bfloat16)
    y_bf16 = jax.block_until_ready(layer_bf16(x))
    assert y_bf16.shape == y.shape
    assert jnp.allclose(y_bf16.astype(jnp.float32), y_ref, atol=5e-2, rtol=5e-2)

    # Max-pool branch.
    pool_layer = EncodeLayer(Cin, Cout, pool_size, pool="max")
    yp = jax.block_until_ready(pool_layer(x))
    assert yp.shape == (N, Cin, H // pool_size, W // pool_size)
    assert jnp.allclose(yp, _ref_pool(x, pool_size, "max"), atol=1e-5, rtol=1e-5)

    # Average-pool branch.
    ave_layer = EncodeLayer(Cin, Cout, pool_size, pool="ave")
    ya = jax.block_until_ready(ave_layer(x))
    assert jnp.allclose(ya, _ref_pool(x, pool_size, "ave"), atol=1e-5, rtol=1e-5)

    print("KERNEL_OK")
</pallas_src>

<mosaic_0001>
module attributes {stable_mosaic.version = 11 : i64} {
  func.func @_conv_kernel(%arg0: i32, %arg1: i32, %arg2: memref<4x2x8x8xf32, #tpu.memory_space<vmem>>, %arg3: memref<2x8x128xf32, #tpu.memory_space<vmem>>, %arg4: memref<1x128xf32, #tpu.memory_space<vmem>>, %arg5: memref<32x128xf32, #tpu.memory_space<vmem>>) attributes {dimension_semantics = [#tpu.dimension_semantics<parallel>, #tpu.dimension_semantics<parallel>], iteration_bounds = array<i64: 4, 1>, scalar_prefetch = 0 : i64, scratch_operands = 0 : i64, tpu.core_type = #tpu.core_type<tc>, window_params = [{transform_indices = @transform_0, window_bounds = array<i64: 4, 2, 8, 8>}, {transform_indices = @transform_1, window_bounds = array<i64: 2, 8, 128>}, {transform_indices = @transform_2, window_bounds = array<i64: 1, 128>}, {transform_indices = @transform_3, window_bounds = array<i64: 32, 128>}]} {
    %c0 = arith.constant 0 : index
    %c0_0 = arith.constant 0 : index
    %c0_1 = arith.constant 0 : index
    %c0_2 = arith.constant 0 : index
    %0 = vector.load %arg2[%c0, %c0_0, %c0_1, %c0_2] : memref<4x2x8x8xf32, #tpu.memory_space<vmem>>, vector<4x1x8x8xf32>
    %1 = vector.shape_cast %0 : vector<4x1x8x8xf32> to vector<4x8x8xf32>
    %2 = vector.shape_cast %1 : vector<4x8x8xf32> to vector<32x8xf32>
    %c0_3 = arith.constant 0 : index
    %c0_4 = arith.constant 0 : index
    %c0_5 = arith.constant 0 : index
    %3 = vector.load %arg3[%c0_3, %c0_4, %c0_5] : memref<2x8x128xf32, #tpu.memory_space<vmem>>, vector<1x8x128xf32>
    %4 = vector.shape_cast %3 : vector<1x8x128xf32> to vector<8x128xf32>
    %cst = arith.constant dense<0.000000e+00> : vector<32x128xf32>
    %5 = tpu.matmul %2, %4, %cst {dimension_numbers = #tpu.dot_dimension_numbers<[1], [0], [0], [1], [0, 0, 1, 1], [], []>} : vector<32x8xf32>, vector<8x128xf32>, vector<32x128xf32> -> vector<32x128xf32>
    %c0_6 = arith.constant 0 : index
    %c1 = arith.constant 1 : index
    %c0_7 = arith.constant 0 : index
    %c0_8 = arith.constant 0 : index
    %6 = vector.load %arg2[%c0_6, %c1, %c0_7, %c0_8] : memref<4x2x8x8xf32, #tpu.memory_space<vmem>>, vector<4x1x8x8xf32>
    %7 = vector.shape_cast %6 : vector<4x1x8x8xf32> to vector<4x8x8xf32>
    %8 = vector.shape_cast %7 : vector<4x8x8xf32> to vector<32x8xf32>
    %c1_9 = arith.constant 1 : index
    %c0_10 = arith.constant 0 : index
    %c0_11 = arith.constant 0 : index
    %9 = vector.load %arg3[%c1_9, %c0_10, %c0_11] : memref<2x8x128xf32, #tpu.memory_space<vmem>>, vector<1x8x128xf32>
    %10 = vector.shape_cast %9 : vector<1x8x128xf32> to vector<8x128xf32>
    %cst_12 = arith.constant dense<0.000000e+00> : vector<32x128xf32>
    %11 = tpu.matmul %8, %10, %cst_12 {dimension_numbers = #tpu.dot_dimension_numbers<[1], [0], [0], [1], [0, 0, 1, 1], [], []>} : vector<32x8xf32>, vector<8x128xf32>, vector<32x128xf32> -> vector<32x128xf32>
    %12 = arith.addf %5, %11 : vector<32x128xf32>
    %c0_13 = arith.constant 0 : index
    %c0_14 = arith.constant 0 : index
    %13 = vector.load %arg4[%c0_13, %c0_14] : memref<1x128xf32, #tpu.memory_space<vmem>>, vector<1x128xf32>
    %14 = vector.broadcast %13 : vector<1x128xf32> to vector<32x128xf32>
    %15 = arith.addf %12, %14 : vector<32x128xf32>
    %cst_15 = arith.constant 0.000000e+00 : f32
    %16 = vector.broadcast %cst_15 : f32 to vector<32x128xf32>
    %17 = arith.maximumf %15, %16 : vector<32x128xf32>
    %c0_16 = arith.constant 0 : index
    %c0_17 = arith.constant 0 : index
    %18 = vector.load %arg5[%c0_16, %c0_17] : memref<32x128xf32, #tpu.memory_space<vmem>>, vector<32x128xf32>
    tpu.vector_store %arg5[%c0_16, %c0_17], %17 {strides = array<i32>} : memref<32x128xf32, #tpu.memory_space<vmem>>, vector<32x128xf32>,
    return
  }
  func.func @transform_0(%arg0: i32, %arg1: i32) -> (i32, i32, i32, i32) {
    %c0_i32 = arith.constant 0 : i32
    %c0_i32_0 = arith.constant 0 : i32
    %c0_i32_1 = arith.constant 0 : i32
    %c0_i32_2 = arith.constant 0 : i32
    return %arg0, %c0_i32, %c0_i32_0, %c0_i32_1 : i32, i32, i32, i32
  }
  func.func @transform_1(%arg0: i32, %arg1: i32) -> (i32, i32, i32) {
    %c0_i32 = arith.constant 0 : i32
    %c0_i32_0 = arith.constant 0 : i32
    %c0_i32_1 = arith.constant 0 : i32
    return %c0_i32, %c0_i32_0, %arg1 : i32, i32, i32
  }
  func.func @transform_2(%arg0: i32, %arg1: i32) -> (i32, i32) {
    %c0_i32 = arith.constant 0 : i32
    %c0_i32_0 = arith.constant 0 : i32
    return %c0_i32, %arg1 : i32, i32
  }
  func.func @transform_3(%arg0: i32, %arg1: i32) -> (i32, i32) {
    %c0_i32 = arith.constant 0 : i32
    return %arg0, %arg1 : i32, i32
  }
}

</mosaic_0001>

<llo_original>
// kernel: tpu_custom_call.1
$region0: #{tpu_custom_call.1}
  #allocation0 [shape = 'u32[]', space=smem, size = 0x4, offset = 0x4, fixed_abs, tag = 'smem constant byte address 0x4 - core index']
  #allocation1 [shape = 'u32[144,128]{1,0:T(1,128)}', space=vmem, size = 0x12000, scoped, tag = 'internal scratch']
  %s0 = inlined_call_operand.vmem [shape: f32[16,2,8,8], index: 0, kind: input, shape index: {}]
  %s1 = inlined_call_operand.vmem [shape: f32[2,8,128], index: 1, kind: input, shape index: {}]
  %s2 = inlined_call_operand.vmem [shape: f32[1,128], index: 2, kind: input, shape index: {}]
  %s3 = inlined_call_operand.hbm [shape: f32[128,128], index: 3, kind: output, shape index: {}]
  %s4 = sld [smem:[#allocation0]]
  $region45: #{tpu_custom_call.1} parent=0
    _
  %s6 = ssub.s32 1, %s4
  %s7 = scalar_select 0, %s6, %s4
  $region1: #{tpu_custom_call.1} parent=0
    #allocation2 [shape = 'u8[32768]{0}', space=vmem, size = 0x8000, scoped, tag = 'output window, operand 0']
    #allocation3 [shape = 's32[2]{0}', space=sflag, size = 0x8, scoped, tag = 'scoped memory for tpu_custom_call.1']
    %8 = vsyncpa [#allocation3], 0
    %s9 = scalar_lea.sflag [#allocation3], 1
    %10 = vsyncpa %s9, 0
    loop: start=0, step=1, limit=6
    $region2: #{tpu_custom_call.1} parent=1 // loop_pre_header
      _
    $region3: #{tpu_custom_call.1} parent=1 // loop_header
      %s12 = sphi 0, %s16
      %p13 = scmp.ge.s32.totalorder %s12, 6
      %s19 = sphi 0, %s31
      %s20 = sphi 0, %s27
      %s21 = sphi 0, %s19
      %s22 = sphi 0, %s20
      %s23 = sphi 0, %s21
      %s24 = sphi 0, %s22
      %s34 = sphi 0, %s36
      %s37 = sphi 0, %s34
      %s38 = sphi 0, %s37
      %s54 = sphi 0, %s38
      %s60 = sphi 0, %s62
      %s63 = sphi 0, %s60
      %s64 = sphi 0, %s63
      %s80 = sphi 0, %s64
      %s86 = sphi 0, %s88
      %s89 = sphi 0, %s86
      %s90 = sphi 0, %s89
      %s106 = sphi 0, %s90
      %s114 = sphi 0, %s116
      %s117 = sphi 0, %s114
      %s118 = sphi 0, %s117
      %s134 = sphi 0, %s118
    $region4: #{tpu_custom_call.1} parent=1 // loop_header_branch
      %15 = sbr.rel (%p13) target = $region8
    $region5: #{tpu_custom_call.1} parent=1 // loop_body
      %s17 = ssub.s32 %s12, 1
      %s18 = ssub.s32 %s12, 2
      %s25 = sadd.s32 1, %s20
      %p26 = scmp.ge.s32.totalorder %s25, 1
      %s27 = scalar_select %p26, 0, %s25
      %s28 = sadd.s32 1, %s19
      %s29 = scalar_select %p26, %s28, %s19
      %p30 = scmp.ge.s32.totalorder %s29, 4
      %s31 = scalar_select %p30, 0, %s29
      %s32 = ssub.s32 %s19, %s31
      %p33 = scmp.eq.s32.totalorder %s32, 0
      %s35 = sadd.s32 %s34, 1
      %s36 = scalar_select %p33, %s34, %s35
      %p39 = pneg %p33
      %p40 = scmp.eq.s32.totalorder %s12, 3
      %p41 = por %p39, %p40
      %p42 = scmp.ne.s32.totalorder %s34, %s37
      %p43 = scmp.eq.s32.totalorder %s12, 0
      %p44 = por %p42, %p43
      %p45 = scmp.ne.s32.totalorder %s34, %s37
      %p46 = scmp.eq.s32.totalorder %s17, 3
      %p47 = por %p45, %p46
      %p48 = scmp.ne.s32.totalorder %s37, %s38
      %p49 = scmp.eq.s32.totalorder %s17, 0
      %p50 = por %p48, %p49
      %p51 = scmp.ne.s32.totalorder %s37, %s38
      %p52 = scmp.eq.s32.totalorder %s18, 3
      %p53 = por %p51, %p52
      %p55 = scmp.ne.s32.totalorder %s38, %s54
      %p56 = scmp.eq.s32.totalorder %s18, 0
      %p57 = por %p55, %p56
      %s58 = ssub.s32 %s20, %s27
      %p59 = scmp.eq.s32.totalorder %s58, 0
      %s61 = sadd.s32 %s60, 1
      %s62 = scalar_select %p59, %s60, %s61
      %p65 = pneg %p59
      %p66 = scmp.eq.s32.totalorder %s12, 3
      %p67 = por %p65, %p66
      %p68 = scmp.ne.s32.totalorder %s60, %s63
      %p69 = scmp.eq.s32.totalorder %s12, 0
      %p70 = por %p68, %p69
      %p71 = scmp.ne.s32.totalorder %s60, %s63
      %p72 = scmp.eq.s32.totalorder %s17, 3
      %p73 = por %p71, %p72
      %p74 = scmp.ne.s32.totalorder %s63, %s64
      %p75 = scmp.eq.s32.totalorder %s17, 0
      %p76 = por %p74, %p75
      %p77 = scmp.ne.s32.totalorder %s63, %s64
      %p78 = scmp.eq.s32.totalorder %s18, 3
      %p79 = por %p77, %p78
      %p81 = scmp.ne.s32.totalorder %s64, %s80
      %p82 = scmp.eq.s32.totalorder %s18, 0
      %p83 = por %p81, %p82
      %s84 = ssub.s32 %s20, %s27
      %p85 = scmp.eq.s32.totalorder %s84, 0
      %s87 = sadd.s32 %s86, 1
      %s88 = scalar_select %p85, %s86, %s87
      %p91 = pneg %p85
      %p92 = scmp.eq.s32.totalorder %s12, 3
      %p93 = por %p91, %p92
      %p94 = scmp.ne.s32.totalorder %s86, %s89
      %p95 = scmp.eq.s32.totalorder %s12, 0
      %p96 = por %p94, %p95
      %p97 = scmp.ne.s32.totalorder %s86, %s89
      %p98 = scmp.eq.s32.totalorder %s17, 3
      %p99 = por %p97, %p98
      %p100 = scmp.ne.s32.totalorder %s89, %s90
      %p101 = scmp.eq.s32.totalorder %s17, 0
      %p102 = por %p100, %p101
      %p103 = scmp.ne.s32.totalorder %s89, %s90
      %p104 = scmp.eq.s32.totalorder %s18, 3
      %p105 = por %p103, %p104
      %p107 = scmp.ne.s32.totalorder %s90, %s106
      %p108 = scmp.eq.s32.totalorder %s18, 0
      %p109 = por %p107, %p108
      %s110 = ssub.s32 %s19, %s31
      %s111 = ssub.s32 %s20, %s27
      %s112 = sor.u32 %s110, %s111
      %p113 = scmp.eq.s32.totalorder %s112, 0
      %s115 = sadd.s32 %s114, 1
      %s116 = scalar_select %p113, %s114, %s115
      %p119 = pneg %p113
      %p120 = scmp.eq.s32.totalorder %s12, 3
      %p121 = por %p119, %p120
      %p122 = scmp.ne.s32.totalorder %s114, %s117
      %p123 = scmp.eq.s32.totalorder %s12, 0
      %p124 = por %p122, %p123
      %p125 = scmp.ne.s32.totalorder %s114, %s117
      %p126 = scmp.eq.s32.totalorder %s17, 3
      %p127 = por %p125, %p126
      %p128 = scmp.ne.s32.totalorder %s117, %s118
      %p129 = scmp.eq.s32.totalorder %s17, 0
      %p130 = por %p128, %p129
      %p131 = scmp.ne.s32.totalorder %s117, %s118
      %p132 = scmp.eq.s32.totalorder %s18, 3
      %p133 = por %p131, %p132
      %p135 = scmp.ne.s32.totalorder %s118, %s134
      %p136 = scmp.eq.s32.totalorder %s18, 0
      %p137 = por %p135, %p136
      %p138 = scmp.le.s32.totalorder 1, %s12
      %p139 = scmp.lt.s32.totalorder %s12, 5
      %p140 = pnand %p138, %p139
      %p141 = pneg %p140
      // Predicated region
      $region9: #{tpu_custom_call.1} parent=5 // pred_check
        _
      $region10: #{tpu_custom_call.1} parent=5 // pred_check_branch
        %143 = sbr.rel (%p140) target = $region12
      $region11: #{tpu_custom_call.1} parent=5 // pred_region
        %s144 = ssub.s32 %s12, 1
        // Predicated region
        $region13: #{tpu_custom_call.1} parent=11 // pred_check
          %p145 = pneg %p76
        $region14: #{tpu_custom_call.1} parent=11 // pred_check_branch
          %147 = sbr.rel (%p145) target = $region16
        $region15: #{tpu_custom_call.1} parent=11 // pred_region
          %p148 = scmp.lt.s32.totalorder %s22, 0
          %s149 = scalar_select %p148, %s22, 0
          %s150 = smul.addr %s149, 8
          %s151 = scalar_lea.vmem %s1, %s150
        $region16: #{tpu_custom_call.1} parent=11 // pred_fallthru
          _
        // Predicated region
        $region17: #{tpu_custom_call.1} parent=11 // pred_check
          %p152 = pneg %p102
        $region18: #{tpu_custom_call.1} parent=11 // pred_check_branch
          %154 = sbr.rel (%p152) target = $region20
        $region19: #{tpu_custom_call.1} parent=11 // pred_region
          %p155 = scmp.lt.s32.totalorder %s22, 0
          %s156 = scalar_select %p155, %s22, 0
          %s157 = scalar_lea.vmem %s2, %s156
        $region20: #{tpu_custom_call.1} parent=11 // pred_fallthru
          _
      $region12: #{tpu_custom_call.1} parent=5 // pred_fallthru
        _
      %p158 = scmp.lt.s32.totalorder %s12, 4
      // Predicated region
      $region21: #{tpu_custom_call.1} parent=5 // pred_check
        %p159 = pneg %p158
      $region22: #{tpu_custom_call.1} parent=5 // pred_check_branch
        %161 = sbr.rel (%p159) target = $region24
      $region23: #{tpu_custom_call.1} parent=5 // pred_region
        // Predicated region
        $region25: #{tpu_custom_call.1} parent=23 // pred_check
          %p162 = pneg %p44
        $region26: #{tpu_custom_call.1} parent=23 // pred_check_branch
          %164 = sbr.rel (%p162) target = $region28
        $region27: #{tpu_custom_call.1} parent=23 // pred_region
          %s165 = smul.u32 4, %s19
          %p166 = scmp.lt.s32.totalorder %s165, 15
          %s167 = scalar_select %p166, %s165, 15
          %s168 = smul.addr %s167, 2
          %s169 = smul.addr %s168, 8
          %s170 = scalar_lea.vmem %s0, %s169
          %s171 = smul.u32 4, %s19
        $region28: #{tpu_custom_call.1} parent=23 // pred_fallthru
          _
      $region24: #{tpu_custom_call.1} parent=5 // pred_fallthru
        _
      %p172 = scmp.le.s32.totalorder 1, %s12
      %p173 = scmp.lt.s32.totalorder %s12, 5
      %p174 = pnand %p172, %p173
      %p175 = pneg %p174
      // Predicated region
      $region29: #{tpu_custom_call.1} parent=5 // pred_check
        _
      $region30: #{tpu_custom_call.1} parent=5 // pred_check_branch
        %177 = sbr.rel (%p174) target = $region32
      $region31: #{tpu_custom_call.1} parent=5 // pred_region
        %s178 = ssub.s32 %s12, 1
        %s179 = smul.u32 4, %s21
        %p180 = scmp.lt.s32.totalorder %s179, 15
        %s181 = scalar_select %p180, %s179, 15
        %s182 = smul.addr %s181, 2
        %s183 = smul.addr %s182, 8
        %s184 = scalar_lea.vmem %s0, %s183
        %p185 = pneg %p50
        %p186 = pneg %p47
        %p187 = scmp.lt.s32.totalorder %s22, 0
        %s188 = scalar_select %p187, %s22, 0
        %s189 = smul.addr %s188, 8
        %s190 = scalar_lea.vmem %s1, %s189
        %p191 = pneg %p76
        %p192 = pneg %p73
        %p193 = scmp.lt.s32.totalorder %s22, 0
        %s194 = scalar_select %p193, %s22, 0
        %s195 = scalar_lea.vmem %s2, %s194
        %p196 = pneg %p102
        %p197 = pneg %p99
        %p198 = pneg %p130
        %p199 = pneg %p127
        %s200 = sand.u32 %s117, 1
        %s201 = scalar_lea.sflag [#allocation3], %s200
        %s202 = sand.u32 %s117, 1
        %s203 = smul.addr %s202, 32
        %s204 = scalar_lea.vmem [#allocation2], %s203
        %s205 = smul.u32 4, %s21
        %p206 = scmp.lt.s32.totalorder %s205, 15
        %s207 = scalar_select %p206, %s205, 15
        %s208 = smul.addr %s207, 2
        %s209 = smul.addr %s208, 8
        %s210 = scalar_lea.vmem %s0, %s209
        %s211 = smul.u32 4, %s21
        %p212 = scmp.lt.s32.totalorder %s22, 0
        %s213 = scalar_select %p212, %s22, 0
        %s214 = smul.addr %s213, 8
        %s215 = scalar_lea.vmem %s1, %s214
        %p216 = scmp.lt.s32.totalorder %s22, 0
        %s217 = scalar_select %p216, %s22, 0
        %s218 = scalar_lea.vmem %s2, %s217
        %s219 = smul.u32 4, %s21
        %v220 = vld [vmem:[%s210] sm:$0xff]
        %v221 = vld [vmem:[%s210 + $0x10] sm:$0xff]
        %v222 = vld [vmem:[%s210 + $0x20] sm:$0xff]
        %v223 = vld [vmem:[%s210 + $0x30] sm:$0xff]
        %v224 = vld [vmem:[%s215] sm:$0xff]
        %s225 = scalar_lea.vmem %s210, 8
        %v226 = vld [vmem:[%s225] sm:$0xff]
        %v227 = vld [vmem:[%s225 + $0x10] sm:$0xff]
        %v228 = vld [vmem:[%s225 + $0x20] sm:$0xff]
        %v229 = vld [vmem:[%s225 + $0x30] sm:$0xff]
        %s230 = scalar_lea.vmem %s215, 8
        %v231 = vld [vmem:[%s230] sm:$0xff]
        %vm232 = vcmask 64512
        %v234 = vsel %vm232, %v226, 0
        %v237 = vsel %vm232, %v227, 0
        %v240 = vsel %vm232, %v228, 0
        %v243 = vsel %vm232, %v229, 0
        %245 = vmatprep.subr.mxu0 0.0
        %246 = vmatpush1.msra.mxu0 %v231
        %247 = vmatprep.subr.mxu0 0.0
        %248 = vmatpush1.msra.mxu0 0.0
        %249 = vmatprep.subr.mxu0 0.0
        %250 = vmatpush1.msra.mxu0 0.0
        %251 = vmatprep.subr.mxu0 0.0
        %252 = vmatpush1.msra.mxu0 0.0
        %253 = vmatprep.subr.mxu0 0.0
        %254 = vmatpush1.msra.mxu0 0.0
        %255 = vmatprep.subr.mxu0 0.0
        %256 = vmatpush1.msra.mxu0 0.0
        %257 = vmatprep.subr.mxu0 0.0
        %258 = vmatpush1.msra.mxu0 0.0
        %259 = vmatprep.subr.mxu0 0.0
        %260 = vmatpush1.msra.mxu0 0.0
        %261 = vmatprep.subr.mxu0 0.0
        %262 = vmatpush1.msra.mxu0 0.0
        %263 = vmatprep.subr.mxu0 0.0
        %264 = vmatpush1.msra.mxu0 0.0
        %265 = vmatprep.subr.mxu0 0.0
        %266 = vmatpush1.msra.mxu0 0.0
        %267 = vmatprep.subr.mxu0 0.0
        %268 = vmatpush1.msra.mxu0 0.0
        %269 = vmatprep.subr.mxu0 0.0
        %270 = vmatpush1.msra.mxu0 0.0
        %271 = vmatprep.subr.mxu0 0.0
        %272 = vmatpush1.msra.mxu0 0.0
        %273 = vmatprep.subr.mxu0 0.0
        %274 = vmatpush1.msra.mxu0 0.0
        %275 = vmatprep.subr.mxu0 0.0
        %276 = vmatpush1.msra.mxu0 0.0
        %277 = vmatprep.subr.mxu0 0.0
        %278 = vmatpush1.msra.mxu0 0.0
        %279 = vmatprep.subr.mxu0 0.0
        %280 = vmatpush1.msra.mxu0 0.0
        %281 = vmatprep.subr.mxu0 0.0
        %282 = vmatpush1.msra.mxu0 0.0
        %283 = vmatprep.subr.mxu0 0.0
        %284 = vmatpush1.msra.mxu0 0.0
        %285 = vmatprep.subr.mxu0 0.0
        %286 = vmatpush1.msra.mxu0 0.0
        %287 = vmatprep.subr.mxu0 0.0
        %288 = vmatpush1.msra.mxu0 0.0
        %289 = vmatprep.subr.mxu0 0.0
        %290 = vmatpush1.msra.mxu0 0.0
        %291 = vmatprep.subr.mxu0 0.0
        %292 = vmatpush1.msra.mxu0 0.0
        %293 = vmatprep.subr.mxu0 0.0
        %294 = vmatpush1.msra.mxu0 0.0
        %295 = vmatprep.subr.mxu0 0.0
        %296 = vmatpush1.msra.mxu0 0.0
        %297 = vmatprep.subr.mxu0 0.0
        %298 = vmatpush1.msra.mxu0 0.0
        %299 = vmatprep.subr.mxu0 0.0
        %300 = vmatpush1.msra.mxu0 0.0
        %301 = vmatprep.subr.mxu0 0.0
        %302 = vmatpush1.msra.mxu0 0.0
        %303 = vmatprep.subr.mxu0 0.0
        %304 = vmatpush1.msra.mxu0 0.0
        %305 = vmatprep.subr.mxu0 0.0
        %306 = vmatpush1.msra.mxu0 0.0
        %307 = vmatprep.subr.mxu0 0.0
        %308 = vmatpush1.msra.mxu0 0.0
        %309 = vmatprep.mubr.f32.mxu0 0.0
        %310 = vmatmul.mubr.f32.gmra.mrb[0].mxu0 %v234
        %v311 = vpop.f32.mrb[0].mxu0
        %v312 = vadd.f32 0.0, %v311
        %v313 = vpop.f32.mrb[0].mxu0
        %314 = vmatprep.mubr.f32.mxu0 0.0
        %315 = vmatmul.mubr.f32.gmra.mrb[0].mxu0 %v237
        %v316 = vpop.f32.mrb[0].mxu0
        %v317 = vadd.f32 0.0, %v316
        %v318 = vpop.f32.mrb[0].mxu0
        %319 = vmatprep.mubr.f32.mxu0 0.0
        %320 = vmatmul.mubr.f32.gmra.mrb[0].mxu0 %v240
        %v321 = vpop.f32.mrb[0].mxu0
        %v322 = vadd.f32 0.0, %v321
        %v323 = vpop.f32.mrb[0].mxu0
        %324 = vmatprep.mubr.f32.mxu0 0.0
        %325 = vmatmul.mubr.f32.gmra.mrb[0].mxu0 %v243
        %v326 = vpop.f32.mrb[0].mxu0
        %v327 = vadd.f32 0.0, %v326
        %v328 = vpop.f32.mrb[0].mxu0
        %329 = vdwg.mxu0
        %v331 = vsel %vm232, %v220, 0
        %v334 = vsel %vm232, %v221, 0
        %v337 = vsel %vm232, %v222, 0
        %v340 = vsel %vm232, %v223, 0
        %342 = vmatprep.subr.mxu0 0.0
        %343 = vmatpush1.msra.mxu0 %v224
        %344 = vmatprep.subr.mxu0 0.0
        %345 = vmatpush1.msra.mxu0 0.0
        %346 = vmatprep.subr.mxu0 0.0
        %347 = vmatpush1.msra.mxu0 0.0
        %348 = vmatprep.subr.mxu0 0.0
        %349 = vmatpush1.msra.mxu0 0.0
        %350 = vmatprep.subr.mxu0 0.0
        %351 = vmatpush1.msra.mxu0 0.0
        %352 = vmatprep.subr.mxu0 0.0
        %353 = vmatpush1.msra.mxu0 0.0
        %354 = vmatprep.subr.mxu0 0.0
        %355 = vmatpush1.msra.mxu0 0.0
        %356 = vmatprep.subr.mxu0 0.0
        %357 = vmatpush1.msra.mxu0 0.0
        %358 = vmatprep.subr.mxu0 0.0
        %359 = vmatpush1.msra.mxu0 0.0
        %360 = vmatprep.subr.mxu0 0.0
        %361 = vmatpush1.msra.mxu0 0.0
        %362 = vmatprep.subr.mxu0 0.0
        %363 = vmatpush1.msra.mxu0 0.0
        %364 = vmatprep.subr.mxu0 0.0
        %365 = vmatpush1.msra.mxu0 0.0
        %366 = vmatprep.subr.mxu0 0.0
        %367 = vmatpush1.msra.mxu0 0.0
        %368 = vmatprep.subr.mxu0 0.0
        %369 = vmatpush1.msra.mxu0 0.0
        %370 = vmatprep.subr.mxu0 0.0
        %371 = vmatpush1.msra.mxu0 0.0
        %372 = vmatprep.subr.mxu0 0.0
        %373 = vmatpush1.msra.mxu0 0.0
        %374 = vmatprep.subr.mxu0 0.0
        %375 = vmatpush1.msra.mxu0 0.0
        %376 = vmatprep.subr.mxu0 0.0
        %377 = vmatpush1.msra.mxu0 0.0
        %378 = vmatprep.subr.mxu0 0.0
        %379 = vmatpush1.msra.mxu0 0.0
        %380 = vmatprep.subr.mxu0 0.0
        %381 = vmatpush1.msra.mxu0 0.0
        %382 = vmatprep.subr.mxu0 0.0
        %383 = vmatpush1.msra.mxu0 0.0
        %384 = vmatprep.subr.mxu0 0.0
        %385 = vmatpush1.msra.mxu0 0.0
        %386 = vmatprep.subr.mxu0 0.0
        %387 = vmatpush1.msra.mxu0 0.0
        %388 = vmatprep.subr.mxu0 0.0
        %389 = vmatpush1.msra.mxu0 0.0
        %390 = vmatprep.subr.mxu0 0.0
        %391 = vmatpush1.msra.mxu0 0.0
        %392 = vmatprep.subr.mxu0 0.0
        %393 = vmatpush1.msra.mxu0 0.0
        %394 = vmatprep.subr.mxu0 0.0
        %395 = vmatpush1.msra.mxu0 0.0
        %396 = vmatprep.subr.mxu0 0.0
        %397 = vmatpush1.msra.mxu0 0.0
        %398 = vmatprep.subr.mxu0 0.0
        %399 = vmatpush1.msra.mxu0 0.0
        %400 = vmatprep.subr.mxu0 0.0
        %401 = vmatpush1.msra.mxu0 0.0
        %402 = vmatprep.subr.mxu0 0.0
        %403 = vmatpush1.msra.mxu0 0.0
        %404 = vmatprep.subr.mxu0 0.0
        %405 = vmatpush1.msra.mxu0 0.0
        %406 = vmatprep.mubr.f32.mxu0 0.0
        %407 = vmatmul.mubr.f32.gmra.mrb[0].mxu0 %v331
        %v408 = vpop.f32.mrb[0].mxu0
        %v409 = vadd.f32 %v312, %v408
        %v410 = vpop.f32.mrb[0].mxu0
        %411 = vmatprep.mubr.f32.mxu0 0.0
        %412 = vmatmul.mubr.f32.gmra.mrb[0].mxu0 %v334
        %v413 = vpop.f32.mrb[0].mxu0
        %v414 = vadd.f32 %v317, %v413
        %v415 = vpop.f32.mrb[0].mxu0
        %416 = vmatprep.mubr.f32.mxu0 0.0
        %417 = vmatmul.mubr.f32.gmra.mrb[0].mxu0 %v337
        %v418 = vpop.f32.mrb[0].mxu0
        %v419 = vadd.f32 %v322, %v418
        %v420 = vpop.f32.mrb[0].mxu0
        %421 = vmatprep.mubr.f32.mxu0 0.0
        %422 = vmatmul.mubr.f32.gmra.mrb[0].mxu0 %v340
        %v423 = vpop.f32.mrb[0].mxu0
        %v424 = vadd.f32 %v327, %v423
        %v425 = vpop.f32.mrb[0].mxu0
        %426 = vdwg.mxu0
        %v427 = vld [vmem:[%s218] sm:$0x1]
        %v429 = vlaneseq
        %v430 = vshrl.u32 %v429, 7
        %v431 = vsub.s32 0, %v430
        %v432 = vrot.slane %v427, %v431
        %v434 = vadd.f32 %v409, %v432
        %v435 = vadd.f32 %v414, %v432
        %v436 = vadd.f32 %v419, %v432
        %v437 = vadd.f32 %v424, %v432
        %v438 = vmax.f32 %v434, 0.0
        %v439 = vmax.f32 %v435, 0.0
        %v440 = vmax.f32 %v436, 0.0
        %v441 = vmax.f32 %v437, 0.0
        %442 = vst [vmem:[%s204] sm:$0xff] %v438
        %443 = vst [vmem:[%s204 + $0x8] sm:$0xff] %v439
        %444 = vst [vmem:[%s204 + $0x10] sm:$0xff] %v440
        %445 = vst [vmem:[%s204 + $0x18] sm:$0xff] %v441
        %s446 = sand.u32 %s117, 1
        %s447 = scalar_lea.sflag [#allocation3], %s446
        %s448 = sand.u32 %s117, 1
        %s449 = smul.addr %s448, 32
        %s450 = scalar_lea.vmem [#allocation2], %s449
        // Predicated region
        $region33: #{tpu_custom_call.1} parent=31 // pred_check
          %p451 = pneg %p127
        $region34: #{tpu_custom_call.1} parent=31 // pred_check_branch
          %453 = sbr.rel (%p451) target = $region36
        $region35: #{tpu_custom_call.1} parent=31 // pred_region
          %s454 = smul.u32 4, %s21
          %s456 = ssub.s32 512, 512
          %457 = vsyncadd %s447, %s456
          %s458 = sadd.s32 %s22, %s454
          %s459 = smul.addr %s458, 128
          %s460 = scalar_lea.hbm %s3, %s459
          %s461 = sshll.u32 %s450, 4
          %s462 = int_to_ptr.vmem [resolvable:$true] %s461
          %467 = dma.vmem_to_hbm [thread:$0]  %s462, 512, %s460, %s447, 128, 128, 8
        $region36: #{tpu_custom_call.1} parent=31 // pred_fallthru
          _
      $region32: #{tpu_custom_call.1} parent=5 // pred_fallthru
        _
      %p468 = scmp.le.s32.totalorder 2, %s12
      // Predicated region
      $region37: #{tpu_custom_call.1} parent=5 // pred_check
        %p469 = pneg %p468
      $region38: #{tpu_custom_call.1} parent=5 // pred_check_branch
        %471 = sbr.rel (%p469) target = $region40
      $region39: #{tpu_custom_call.1} parent=5 // pred_region
        %s472 = ssub.s32 %s12, 2
        // Predicated region
        $region41: #{tpu_custom_call.1} parent=39 // pred_check
          %p473 = pneg %p133
        $region42: #{tpu_custom_call.1} parent=39 // pred_check_branch
          %475 = sbr.rel (%p473) target = $region44
        $region43: #{tpu_custom_call.1} parent=39 // pred_region
          %s476 = sand.u32 %s118, 1
          %s477 = scalar_lea.sflag [#allocation3], %s476
          %s478 = sand.u32 %s118, 1
          %s479 = smul.addr %s478, 32
          %s480 = scalar_lea.vmem [#allocation2], %s479
          %481 = dma.done %s477, 512
        $region44: #{tpu_custom_call.1} parent=39 // pred_fallthru
          _
      $region40: #{tpu_custom_call.1} parent=5 // pred_fallthru
        _
    $region6: #{tpu_custom_call.1} parent=1 // loop_footer
      %s16 = sadd.s32 1, %s12
    $region7: #{tpu_custom_call.1} parent=1 // loop_footer_branch
      %11 = sbr.rel target = $region3
    $region8: #{tpu_custom_call.1} parent=1 // loop_exit
      _
    %482 = vsyncpa [#allocation3], 1
    %s483 = scalar_lea.sflag [#allocation3], 1
    %484 = vsyncpa %s483, 1

</llo_original>
